<compile_context>
chip_gen: v7x
topology: tpu7x:2x2x1
jax: 0.10.0
libtpu: 0.0.40
codegen_flags: <defaults>
</compile_context>

<pallas_src>
import functools

import jax
import jax.numpy as jnp
from jax import lax
from jax.experimental import pallas as pl
from jax.experimental.pallas import tpu as pltpu

HIDDEN = 128


def _round_up(x, m):
    return (x + m - 1) // m * m


# ---------------------------------------------------------------------------
# Kernel: one batch tile of TB rows per grid step.
# ---------------------------------------------------------------------------
def _dueling_kernel(x_ref,
                    w1_ref, b1_ref,
                    w2_ref, b2_ref,
                    w3_ref, b3_ref,      # fused [fc3_adv | fc3_val]   (128, 256) bf16
                    w4_ref, b4_ref,      # fused/padded fc4_adv+fc4_val (256, 128) bf16
                    out_ref, *psum_refs,
                    action_size, batch, tile_b, single_tile):
    f32 = jnp.float32
    bf16 = jnp.bfloat16

    x = x_ref[...].astype(bf16)                                       # (TB, S)

    # fc1 + relu   (bf16 MXU operands, f32 accumulate; elementwise stays f32)
    h = jnp.dot(x, w1_ref[...], preferred_element_type=f32) + b1_ref[...]
    h = jnp.maximum(h, 0.0)
    # fc2 + relu
    h = jnp.dot(h.astype(bf16), w2_ref[...], preferred_element_type=f32) + b2_ref[...]
    h = jnp.maximum(h, 0.0)

    # fused noisy hidden heads: (TB,128) @ (128,256) -> [adv_hidden | val_hidden]
    head = jnp.dot(h.astype(bf16), w3_ref[...], preferred_element_type=f32) + b3_ref[...]
    head = jnp.maximum(head, 0.0)                                      # (TB, 256)

    # fused output heads: cols [0:A] = adv, col A = val, cols A+1.. exact zeros
    res = jnp.dot(head.astype(bf16), w4_ref[...],
                  preferred_element_type=f32) + b4_ref[...]            # (TB, 128)

    val = res[:, action_size:action_size + 1]                          # (TB, 1)
    # lane-sum over all 128 cols = sum(adv cols) + val + 0  ->  per-row adv sum
    adv_rowsum = jnp.sum(res, axis=-1, keepdims=True) - val            # (TB, 1)

    # Mask padded batch rows so they never contaminate the global adv mean.
    row = (pl.program_id(0) * tile_b
           + lax.broadcasted_iota(jnp.int32, adv_rowsum.shape, 0))
    adv_rowsum = jnp.where(row < batch, adv_rowsum, 0.0)

    if single_tile:
        # Grid of 1: finish everything in-kernel, no JAX epilogue / extra HBM pass.
        adv_mean = jnp.sum(adv_rowsum) / f32(batch * action_size)
        out_ref[...] = res + val - adv_mean
    else:
        out_ref[...] = res + val                                       # q before mean corr.
        psum_ref = psum_refs[0]                                        # (1, 8, 128)
        psum_ref[...] = jnp.full(psum_ref.shape, jnp.sum(adv_rowsum), f32)


# ---------------------------------------------------------------------------
# Wrapper
# ---------------------------------------------------------------------------
def dueling_q_forward(state, params, action_size, *, block_b=512):
    """state: (B, state_size) f32. params: fused kernel params from make_params."""
    B, S = state.shape
    A = int(action_size)
    assert 1 <= A < HIDDEN  # padded-head fusion needs A + 1 <= 128

    b_pad8 = max(8, _round_up(B, 8))
    if b_pad8 <= block_b:
        # Single-tile fast path (typical RL inference batch).
        tb = b_pad8
        b_pad = tb
        single_tile = True
    else:
        # Multi-tile: big tiles amortize the ~0.35 us per-grid-step cost; 256-multiples
        # fill the v6e/v7x 256x256 MXU; block_b=512 keeps >=2 tiles for batches > 512
        # so both v7x TensorCores get work on the "parallel" batch axis.
        tb = _round_up(min(block_b, b_pad8), 8)
        if tb >= 256:
            tb = _round_up(tb, 256)
        b_pad = _round_up(b_pad8, tb)
        single_tile = False

    x = state if b_pad == B else jnp.pad(state, ((0, b_pad - B), (0, 0)))
    num_tiles = b_pad // tb

    const = lambda i: (0, 0)  # constant block index -> no per-step weight re-DMA
    in_specs = [
        pl.BlockSpec((tb, S), lambda i: (i, 0)),          # activations (batch-tiled)
        pl.BlockSpec((S, HIDDEN), const),                 # w1 (bf16)
        pl.BlockSpec((1, HIDDEN), const),                 # b1
        pl.BlockSpec((HIDDEN, HIDDEN), const),            # w2 (bf16)
        pl.BlockSpec((1, HIDDEN), const),                 # b2
        pl.BlockSpec((HIDDEN, 2 * HIDDEN), const),        # w3 fused (bf16)
        pl.BlockSpec((1, 2 * HIDDEN), const),             # b3 fused
        pl.BlockSpec((2 * HIDDEN, HIDDEN), const),        # w4 fused, zero-padded (bf16)
        pl.BlockSpec((1, HIDDEN), const),                 # b4 fused, zero-padded
    ]
    kernel = functools.partial(_dueling_kernel, action_size=A, batch=B,
                               tile_b=tb, single_tile=single_tile)
    args = (x,
            params["w1"], params["b1"],
            params["w2"], params["b2"],
            params["w3"], params["b3"],
            params["w4"], params["b4"])
    cparams = pltpu.CompilerParams(dimension_semantics=("parallel",))

    if single_tile:
        out = pl.pallas_call(
            kernel,
            out_shape=jax.ShapeDtypeStruct((b_pad, HIDDEN), jnp.float32),
            grid=(1,),
            in_specs=in_specs,
            out_specs=pl.BlockSpec((tb, HIDDEN), lambda i: (i, 0)),
            compiler_params=cparams,
        )(*args)
        return out[:B, :A]

    out, psums = pl.pallas_call(
        kernel,
        out_shape=(jax.ShapeDtypeStruct((b_pad, HIDDEN), jnp.float32),
                   jax.ShapeDtypeStruct((num_tiles, 8, HIDDEN), jnp.float32)),
        grid=(num_tiles,),
        in_specs=in_specs,
        out_specs=(pl.BlockSpec((tb, HIDDEN), lambda i: (i, 0)),
                   pl.BlockSpec((1, 8, HIDDEN), lambda i: (i, 0, 0))),
        compiler_params=cparams,
    )(*args)

    # Tiny epilogue: sum num_tiles partial adv sums -> global mean (PyTorch semantics:
    # mean over batch * actions).
    adv_mean = jnp.sum(psums[:, 0, 0]) / (B * A)
    return out[:B, :A] - adv_mean


# ---------------------------------------------------------------------------
# Deterministic parameter construction (mirrors the PyTorch init scheme).
# ---------------------------------------------------------------------------
def _linear_init(key, in_f, out_f):
    k_w, k_b = jax.random.split(key)
    bound = 1.0 / jnp.sqrt(jnp.float32(in_f))
    w = jax.random.uniform(k_w, (out_f, in_f), jnp.float32, -bound, bound)
    b = jax.random.uniform(k_b, (out_f,), jnp.float32, -bound, bound)
    return w, b


def _scale_noise(key, size):
    x = jax.random.normal(key, (size,), jnp.float32)
    return jnp.sign(x) * jnp.sqrt(jnp.abs(x))


def _noisy_linear_init(key, in_f, out_f, std_init=0.5):
    k_mu_w, k_mu_b, k_eps_in, k_eps_out, k_eps_b = jax.random.split(key, 5)
    mu_range = 1.0 / jnp.sqrt(jnp.float32(in_f))
    weight_mu = jax.random.uniform(k_mu_w, (out_f, in_f), jnp.float32, -mu_range, mu_range)
    weight_sigma = jnp.full((out_f, in_f), std_init / jnp.sqrt(jnp.float32(in_f)), jnp.float32)
    bias_mu = jax.random.uniform(k_mu_b, (out_f,), jnp.float32, -mu_range, mu_range)
    bias_sigma = jnp.full((out_f,), std_init / jnp.sqrt(jnp.float32(out_f)), jnp.float32)
    eps_in = _scale_noise(k_eps_in, in_f)
    eps_out = _scale_noise(k_eps_out, out_f)
    # training=True path of NoisyLinear.forward: effective weights use the noise.
    w_eff = weight_mu + weight_sigma * jnp.outer(eps_out, eps_in)
    b_eff = bias_mu + bias_sigma * _scale_noise(k_eps_b, out_f)
    return w_eff, b_eff


def make_params(key, state_size, action_size):
    keys = jax.random.split(key, 6)
    w1, b1 = _linear_init(keys[0], state_size, HIDDEN)
    w2, b2 = _linear_init(keys[1], HIDDEN, HIDDEN)
    w3a, b3a = _noisy_linear_init(keys[2], HIDDEN, HIDDEN)
    w4a, b4a = _noisy_linear_init(keys[3], HIDDEN, action_size)
    w3v, b3v = _noisy_linear_init(keys[4], HIDDEN, HIDDEN)
    w4v, b4v = _noisy_linear_init(keys[5], HIDDEN, 1)

    # ---- per-layer (pre-transposed) params for the plain-JAX f32 reference ----
    ref = dict(w1=w1.T, b1=b1, w2=w2.T, b2=b2,
               w3a=w3a.T, b3a=b3a, w4a=w4a.T, b4a=b4a,
               w3v=w3v.T, b3v=b3v, w4v=w4v.T, b4v=b4v)

    # ---- fused kernel params (weights bf16, biases f32) ----
    w3 = jnp.concatenate([w3a.T, w3v.T], axis=1)                   # (128, 256)
    b3 = jnp.concatenate([b3a, b3v]).reshape(1, -1)                # (1, 256)
    w4 = jnp.zeros((2 * HIDDEN, HIDDEN), jnp.float32)
    w4 = w4.at[:HIDDEN, :action_size].set(w4a.T)                   # adv head rows
    w4 = w4.at[HIDDEN:, action_size].set(w4v[0, :])                # val head row -> col A
    b4 = jnp.zeros((1, HIDDEN), jnp.float32)
    b4 = b4.at[0, :action_size].set(b4a)
    b4 = b4.at[0, action_size].set(b4v[0])

    bf16 = jnp.bfloat16
    kernel_params = dict(
        w1=w1.T.astype(bf16), b1=b1.reshape(1, -1),
        w2=w2.T.astype(bf16), b2=b2.reshape(1, -1),
        w3=w3.astype(bf16), b3=b3,
        w4=w4.astype(bf16), b4=b4)                  # padded zeros stay exactly 0 in bf16
    return kernel_params, ref


def _reference_forward(state, rp):
    """Plain-JAX f32 reference matching the PyTorch forward exactly."""
    relu = lambda z: jnp.maximum(z, 0.0)
    h = relu(state @ rp["w1"] + rp["b1"])
    h = relu(h @ rp["w2"] + rp["b2"])
    a = relu(h @ rp["w3a"] + rp["b3a"])
    adv = a @ rp["w4a"] + rp["b4a"]
    v = relu(h @ rp["w3v"] + rp["b3v"])
    val = v @ rp["w4v"] + rp["b4v"]
    return val + adv - jnp.mean(adv)          # global mean over batch*actions


if __name__ == "__main__":
    state_size = 32
    action_size = 16

    key = jax.random.PRNGKey(0)
    k_params, k_s1, k_s2 = jax.random.split(key, 3)
    kernel_params, ref_params = make_params(k_params, state_size, action_size)

    # bf16 MXU operands vs f32 reference -> loosened tolerance.
    TOL = 3e-2

    # 1) single-tile fast path (typical small RL batch).
    state1 = jax.random.normal(k_s1, (4, state_size), jnp.float32)
    out1 = jax.block_until_ready(dueling_q_forward(state1, kernel_params, action_size))
    ref1 = _reference_forward(state1, ref_params)
    assert out1.shape == (4, action_size)
    assert jnp.allclose(out1, ref1, atol=TOL, rtol=TOL), "single-tile mismatch vs reference"

    # 2) multi-tile path (small block_b override forces several grid steps + row masking).
    state2 = jax.random.normal(k_s2, (20, state_size), jnp.float32)
    out2 = jax.block_until_ready(
        dueling_q_forward(state2, kernel_params, action_size, block_b=8))
    ref2 = _reference_forward(state2, ref_params)
    assert out2.shape == (20, action_size)
    assert jnp.allclose(out2, ref2, atol=TOL, rtol=TOL), "multi-tile mismatch vs reference"

    print("KERNEL_OK")
</pallas_src>

<mosaic_0001>
module attributes {stable_mosaic.version = 11 : i64} {
  func.func @_dueling_kernel(%arg0: i32, %arg1: memref<8x32xf32, #tpu.memory_space<vmem>>, %arg2: memref<32x128xbf16, #tpu.memory_space<vmem>>, %arg3: memref<1x128xf32, #tpu.memory_space<vmem>>, %arg4: memref<128x128xbf16, #tpu.memory_space<vmem>>, %arg5: memref<1x128xf32, #tpu.memory_space<vmem>>, %arg6: memref<128x256xbf16, #tpu.memory_space<vmem>>, %arg7: memref<1x256xf32, #tpu.memory_space<vmem>>, %arg8: memref<256x128xbf16, #tpu.memory_space<vmem>>, %arg9: memref<1x128xf32, #tpu.memory_space<vmem>>, %arg10: memref<8x128xf32, #tpu.memory_space<vmem>>) attributes {dimension_semantics = [#tpu.dimension_semantics<parallel>], iteration_bounds = array<i64: 1>, scalar_prefetch = 0 : i64, scratch_operands = 0 : i64, tpu.core_type = #tpu.core_type<tc>, window_params = [{transform_indices = @transform_0, window_bounds = array<i64: 8, 32>}, {pipeline_mode = #tpu.pipeline_mode<synchronous>, transform_indices = @transform_1, window_bounds = array<i64: 32, 128>}, {pipeline_mode = #tpu.pipeline_mode<synchronous>, transform_indices = @transform_2, window_bounds = array<i64: 1, 128>}, {pipeline_mode = #tpu.pipeline_mode<synchronous>, transform_indices = @transform_3, window_bounds = array<i64: 128, 128>}, {pipeline_mode = #tpu.pipeline_mode<synchronous>, transform_indices = @transform_4, window_bounds = array<i64: 1, 128>}, {pipeline_mode = #tpu.pipeline_mode<synchronous>, transform_indices = @transform_5, window_bounds = array<i64: 128, 256>}, {pipeline_mode = #tpu.pipeline_mode<synchronous>, transform_indices = @transform_6, window_bounds = array<i64: 1, 256>}, {pipeline_mode = #tpu.pipeline_mode<synchronous>, transform_indices = @transform_7, window_bounds = array<i64: 256, 128>}, {pipeline_mode = #tpu.pipeline_mode<synchronous>, transform_indices = @transform_8, window_bounds = array<i64: 1, 128>}, {transform_indices = @transform_9, window_bounds = array<i64: 8, 128>}]} {
    %c0 = arith.constant 0 : index
    %c0_0 = arith.constant 0 : index
    %0 = vector.load %arg1[%c0, %c0_0] : memref<8x32xf32, #tpu.memory_space<vmem>>, vector<8x32xf32>
    %1 = arith.truncf %0 : vector<8x32xf32> to vector<8x32xbf16>
    %c0_1 = arith.constant 0 : index
    %c0_2 = arith.constant 0 : index
    %2 = vector.load %arg2[%c0_1, %c0_2] : memref<32x128xbf16, #tpu.memory_space<vmem>>, vector<32x128xbf16>
    %cst = arith.constant dense<0.000000e+00> : vector<8x128xf32>
    %3 = tpu.matmul %1, %2, %cst {dimension_numbers = #tpu.dot_dimension_numbers<[1], [0], [0], [1], [0, 0, 1, 1], [], []>} : vector<8x32xbf16>, vector<32x128xbf16>, vector<8x128xf32> -> vector<8x128xf32>
    %c0_3 = arith.constant 0 : index
    %c0_4 = arith.constant 0 : index
    %4 = vector.load %arg3[%c0_3, %c0_4] : memref<1x128xf32, #tpu.memory_space<vmem>>, vector<1x128xf32>
    %5 = vector.broadcast %4 : vector<1x128xf32> to vector<8x128xf32>
    %6 = arith.addf %3, %5 : vector<8x128xf32>
    %cst_5 = arith.constant 0.000000e+00 : f32
    %7 = vector.broadcast %cst_5 : f32 to vector<8x128xf32>
    %8 = arith.maximumf %6, %7 : vector<8x128xf32>
    %9 = arith.truncf %8 : vector<8x128xf32> to vector<8x128xbf16>
    %c0_6 = arith.constant 0 : index
    %c0_7 = arith.constant 0 : index
    %10 = vector.load %arg4[%c0_6, %c0_7] : memref<128x128xbf16, #tpu.memory_space<vmem>>, vector<128x128xbf16>
    %cst_8 = arith.constant dense<0.000000e+00> : vector<8x128xf32>
    %11 = tpu.matmul %9, %10, %cst_8 {dimension_numbers = #tpu.dot_dimension_numbers<[1], [0], [0], [1], [0, 0, 1, 1], [], []>} : vector<8x128xbf16>, vector<128x128xbf16>, vector<8x128xf32> -> vector<8x128xf32>
    %c0_9 = arith.constant 0 : index
    %c0_10 = arith.constant 0 : index
    %12 = vector.load %arg5[%c0_9, %c0_10] : memref<1x128xf32, #tpu.memory_space<vmem>>, vector<1x128xf32>
    %13 = vector.broadcast %12 : vector<1x128xf32> to vector<8x128xf32>
    %14 = arith.addf %11, %13 : vector<8x128xf32>
    %cst_11 = arith.constant 0.000000e+00 : f32
    %15 = vector.broadcast %cst_11 : f32 to vector<8x128xf32>
    %16 = arith.maximumf %14, %15 : vector<8x128xf32>
    %17 = arith.truncf %16 : vector<8x128xf32> to vector<8x128xbf16>
    %c0_12 = arith.constant 0 : index
    %c0_13 = arith.constant 0 : index
    %18 = vector.load %arg6[%c0_12, %c0_13] : memref<128x256xbf16, #tpu.memory_space<vmem>>, vector<128x256xbf16>
    %cst_14 = arith.constant dense<0.000000e+00> : vector<8x256xf32>
    %19 = tpu.matmul %17, %18, %cst_14 {dimension_numbers = #tpu.dot_dimension_numbers<[1], [0], [0], [1], [0, 0, 1, 1], [], []>} : vector<8x128xbf16>, vector<128x256xbf16>, vector<8x256xf32> -> vector<8x256xf32>
    %c0_15 = arith.constant 0 : index
    %c0_16 = arith.constant 0 : index
    %20 = vector.load %arg7[%c0_15, %c0_16] : memref<1x256xf32, #tpu.memory_space<vmem>>, vector<1x256xf32>
    %21 = vector.broadcast %20 : vector<1x256xf32> to vector<8x256xf32>
    %22 = arith.addf %19, %21 : vector<8x256xf32>
    %cst_17 = arith.constant 0.000000e+00 : f32
    %23 = vector.broadcast %cst_17 : f32 to vector<8x256xf32>
    %24 = arith.maximumf %22, %23 : vector<8x256xf32>
    %25 = arith.truncf %24 : vector<8x256xf32> to vector<8x256xbf16>
    %c0_18 = arith.constant 0 : index
    %c0_19 = arith.constant 0 : index
    %26 = vector.load %arg8[%c0_18, %c0_19] : memref<256x128xbf16, #tpu.memory_space<vmem>>, vector<256x128xbf16>
    %cst_20 = arith.constant dense<0.000000e+00> : vector<8x128xf32>
    %27 = tpu.matmul %25, %26, %cst_20 {dimension_numbers = #tpu.dot_dimension_numbers<[1], [0], [0], [1], [0, 0, 1, 1], [], []>} : vector<8x256xbf16>, vector<256x128xbf16>, vector<8x128xf32> -> vector<8x128xf32>
    %c0_21 = arith.constant 0 : index
    %c0_22 = arith.constant 0 : index
    %28 = vector.load %arg9[%c0_21, %c0_22] : memref<1x128xf32, #tpu.memory_space<vmem>>, vector<1x128xf32>
    %29 = vector.broadcast %28 : vector<1x128xf32> to vector<8x128xf32>
    %30 = arith.addf %27, %29 : vector<8x128xf32>
    %31 = vector.extract_strided_slice %30 {offsets = [0, 16], sizes = [8, 1], strides = [1, 1]} : vector<8x128xf32> to vector<8x1xf32>
    %cst_23 = arith.constant dense<0.000000e+00> : vector<8xf32>
    %32 = vector.multi_reduction <add>, %30, %cst_23 [1] : vector<8x128xf32> to vector<8xf32>
    %33 = vector.shape_cast %32 : vector<8xf32> to vector<8x1xf32>
    %34 = arith.subf %33, %31 : vector<8x1xf32>
    %c8_i32 = arith.constant 8 : i32
    %35 = arith.muli %arg0, %c8_i32 : i32
    %36 = tpu.iota {dimensions = array<i32: 0>} : vector<8x1xi32>
    %37 = vector.broadcast %35 : i32 to vector<8x1xi32>
    %38 = arith.addi %37, %36 : vector<8x1xi32>
    %c4_i32 = arith.constant 4 : i32
    %39 = vector.broadcast %c4_i32 : i32 to vector<8x1xi32>
    %40 = arith.cmpi slt, %38, %39 : vector<8x1xi32>
    %cst_24 = arith.constant 0.000000e+00 : f32
    %41 = vector.broadcast %cst_24 : f32 to vector<8x1xf32>
    %42 = arith.select %40, %34, %41 : vector<8x1xi1>, vector<8x1xf32>
    %43 = vector.shape_cast %42 : vector<8x1xf32> to vector<1x8x1xf32>
    %cst_25 = arith.constant dense<0.000000e+00> : vector<1xf32>
    %44 = vector.multi_reduction <add>, %43, %cst_25 [1, 2] : vector<1x8x1xf32> to vector<1xf32>
    %45 = vector.shape_cast %44 : vector<1xf32> to vector<1x1x1xf32>
    %46 = vector.extract %45[0, 0, 0] : f32 from vector<1x1x1xf32>
    %cst_26 = arith.constant 6.400000e+01 : f32
    %47 = arith.divf %46, %cst_26 : f32
    %48 = vector.broadcast %31 : vector<8x1xf32> to vector<8x128xf32>
    %49 = arith.addf %30, %48 : vector<8x128xf32>
    %50 = vector.broadcast %47 : f32 to vector<8x128xf32>
    %51 = arith.subf %49, %50 : vector<8x128xf32>
    %c0_27 = arith.constant 0 : index
    %c0_28 = arith.constant 0 : index
    %52 = vector.load %arg10[%c0_27, %c0_28] : memref<8x128xf32, #tpu.memory_space<vmem>>, vector<8x128xf32>
    tpu.vector_store %arg10[%c0_27, %c0_28], %51 {strides = array<i32>} : memref<8x128xf32, #tpu.memory_space<vmem>>, vector<8x128xf32>,
    return
  }
  func.func @transform_0(%arg0: i32) -> (i32, i32) {
    %c0_i32 = arith.constant 0 : i32
    %c0_i32_0 = arith.constant 0 : i32
    return %arg0, %c0_i32 : i32, i32
  }
  func.func @transform_1(%arg0: i32) -> (i32, i32) {
    %c0_i32 = arith.constant 0 : i32
    %c0_i32_0 = arith.constant 0 : i32
    %c0_i32_1 = arith.constant 0 : i32
    return %c0_i32, %c0_i32_0 : i32, i32
  }
  func.func @transform_2(%arg0: i32) -> (i32, i32) {
    %c0_i32 = arith.constant 0 : i32
    %c0_i32_0 = arith.constant 0 : i32
    %c0_i32_1 = arith.constant 0 : i32
    return %c0_i32, %c0_i32_0 : i32, i32
  }
  func.func @transform_3(%arg0: i32) -> (i32, i32) {
    %c0_i32 = arith.constant 0 : i32
    %c0_i32_0 = arith.constant 0 : i32
    %c0_i32_1 = arith.constant 0 : i32
    return %c0_i32, %c0_i32_0 : i32, i32
  }
  func.func @transform_4(%arg0: i32) -> (i32, i32) {
    %c0_i32 = arith.constant 0 : i32
    %c0_i32_0 = arith.constant 0 : i32
    %c0_i32_1 = arith.constant 0 : i32
    return %c0_i32, %c0_i32_0 : i32, i32
  }
  func.func @transform_5(%arg0: i32) -> (i32, i32) {
    %c0_i32 = arith.constant 0 : i32
    %c0_i32_0 = arith.constant 0 : i32
    %c0_i32_1 = arith.constant 0 : i32
    return %c0_i32, %c0_i32_0 : i32, i32
  }
  func.func @transform_6(%arg0: i32) -> (i32, i32) {
    %c0_i32 = arith.constant 0 : i32
    %c0_i32_0 = arith.constant 0 : i32
    %c0_i32_1 = arith.constant 0 : i32
    return %c0_i32, %c0_i32_0 : i32, i32
  }
  func.func @transform_7(%arg0: i32) -> (i32, i32) {
    %c0_i32 = arith.constant 0 : i32
    %c0_i32_0 = arith.constant 0 : i32
    %c0_i32_1 = arith.constant 0 : i32
    return %c0_i32, %c0_i32_0 : i32, i32
  }
  func.func @transform_8(%arg0: i32) -> (i32, i32) {
    %c0_i32 = arith.constant 0 : i32
    %c0_i32_0 = arith.constant 0 : i32
    %c0_i32_1 = arith.constant 0 : i32
    return %c0_i32, %c0_i32_0 : i32, i32
  }
  func.func @transform_9(%arg0: i32) -> (i32, i32) {
    %c0_i32 = arith.constant 0 : i32
    %c0_i32_0 = arith.constant 0 : i32
    return %arg0, %c0_i32 : i32, i32
  }
}

</mosaic_0001>

<llo_original>
// kernel: tpu_custom_call.1
$region0: #{tpu_custom_call.1}
  #allocation0 [shape = 'u32[]', space=smem, size = 0x4, offset = 0x4, fixed_abs, tag = 'smem constant byte address 0x4 - core index']
  #allocation1 [shape = 'u32[144,128]{1,0:T(1,128)}', space=vmem, size = 0x12000, scoped, tag = 'internal scratch']
  %s0 = inlined_call_operand.hbm [shape: f32[8,32], index: 0, kind: input, shape index: {}]
  %s1 = inlined_call_operand.hbm [shape: bf16[32,128], index: 1, kind: input, shape index: {}]
  %s2 = inlined_call_operand.vmem [shape: f32[1,128], index: 2, kind: input, shape index: {}]
  %s3 = inlined_call_operand.hbm [shape: bf16[128,128], index: 3, kind: input, shape index: {}]
  %s4 = inlined_call_operand.vmem [shape: f32[1,128], index: 4, kind: input, shape index: {}]
  %s5 = inlined_call_operand.hbm [shape: bf16[128,256], index: 5, kind: input, shape index: {}]
  %s6 = inlined_call_operand.vmem [shape: f32[1,256], index: 6, kind: input, shape index: {}]
  %s7 = inlined_call_operand.hbm [shape: bf16[256,128], index: 7, kind: input, shape index: {}]
  %s8 = inlined_call_operand.vmem [shape: f32[1,128], index: 8, kind: input, shape index: {}]
  %s9 = inlined_call_operand.hbm [shape: f32[8,128], index: 9, kind: output, shape index: {}]
  %s10 = sld [smem:[#allocation0]]
  $region66: #{tpu_custom_call.1} parent=0
    _
  %s12 = ssub.s32 1, %s10
  %s13 = scalar_select 0, %s12, %s10
  $region1: #{tpu_custom_call.1} parent=0
    #allocation2 [shape = 'u8[4096]{0}', space=vmem, size = 0x1000, scoped, tag = 'input window, operand 0, single buffered']
    #allocation3 [shape = 's32[1]{0}', space=sflag, size = 0x4, scoped, tag = 'scoped memory for tpu_custom_call.1']
    #allocation4 [shape = 's32[1]{0}', space=sflag, size = 0x4, scoped, tag = 'scoped memory for tpu_custom_call.1']
    #allocation5 [shape = 'u8[8192]{0}', space=vmem, size = 0x2000, scoped, tag = 'input window, operand 1, single buffered']
    #allocation6 [shape = 's32[1]{0}', space=sflag, size = 0x4, scoped, tag = 'scoped memory for tpu_custom_call.1']
    #allocation7 [shape = 'u8[32768]{0}', space=vmem, size = 0x8000, scoped, tag = 'input window, operand 3, single buffered']
    #allocation8 [shape = 'u8[65536]{0}', space=vmem, size = 0x10000, scoped, tag = 'input window, operand 5, single buffered']
    #allocation9 [shape = 's32[1]{0}', space=sflag, size = 0x4, scoped, tag = 'scoped memory for tpu_custom_call.1']
    #allocation10 [shape = 'u8[65536]{0}', space=vmem, size = 0x10000, scoped, tag = 'input window, operand 7, single buffered']
    #allocation11 [shape = 'u8[4096]{0}', space=vmem, size = 0x1000, scoped, tag = 'output window, operand 0, single buffered']
    %14 = vsyncpa [#allocation3], 0
    %15 = vsyncpa [#allocation6], 0
    %16 = vsyncpa [#allocation9], 0
    %17 = vsyncpa [#allocation4], 0
    // Predicated region
    $region2: #{tpu_custom_call.1} parent=1 // pred_check
      _
    $region3: #{tpu_custom_call.1} parent=1 // pred_check_branch
      %19 = sbr.rel (0) target = $region5
    $region4: #{tpu_custom_call.1} parent=1 // pred_region
      %s21 = ssub.s32 128, 128
      %22 = vsyncadd [#allocation3], %s21
      %s24 = sshll.u32 [#allocation2], 4
      %s25 = int_to_ptr.vmem [resolvable:$true] %s24
      %27 = dma.hbm_to_vmem [thread:$0]  %s0, 128, %s25, [#allocation3]
    $region5: #{tpu_custom_call.1} parent=1 // pred_fallthru
      _
    // Predicated region
    $region6: #{tpu_custom_call.1} parent=1 // pred_check
      _
    $region7: #{tpu_custom_call.1} parent=1 // pred_check_branch
      %29 = sbr.rel (0) target = $region9
    $region8: #{tpu_custom_call.1} parent=1 // pred_region
      %s31 = ssub.s32 256, 256
      %32 = vsyncadd [#allocation6], %s31
      %s33 = sshll.u32 [#allocation5], 4
      %s34 = int_to_ptr.vmem [resolvable:$true] %s33
      %39 = dma.hbm_to_vmem [thread:$0]  %s1, 256, %s34, [#allocation6], 64, 64, 4
    $region9: #{tpu_custom_call.1} parent=1 // pred_fallthru
      _
    // Predicated region
    $region10: #{tpu_custom_call.1} parent=1 // pred_check
      _
    $region11: #{tpu_custom_call.1} parent=1 // pred_check_branch
      %41 = sbr.rel (0) target = $region13
    $region12: #{tpu_custom_call.1} parent=1 // pred_region
      _
    $region13: #{tpu_custom_call.1} parent=1 // pred_fallthru
      _
    // Predicated region
    $region14: #{tpu_custom_call.1} parent=1 // pred_check
      _
    $region15: #{tpu_custom_call.1} parent=1 // pred_check_branch
      %43 = sbr.rel (0) target = $region17
    $region16: #{tpu_custom_call.1} parent=1 // pred_region
      %s45 = ssub.s32 1024, 1024
      %46 = vsyncadd [#allocation6], %s45
      %s47 = sshll.u32 [#allocation7], 4
      %s48 = int_to_ptr.vmem [resolvable:$true] %s47
      %53 = dma.hbm_to_vmem [thread:$0]  %s3, 1024, %s48, [#allocation6], 64, 64, 4
    $region17: #{tpu_custom_call.1} parent=1 // pred_fallthru
      _
    // Predicated region
    $region18: #{tpu_custom_call.1} parent=1 // pred_check
      _
    $region19: #{tpu_custom_call.1} parent=1 // pred_check_branch
      %55 = sbr.rel (0) target = $region21
    $region20: #{tpu_custom_call.1} parent=1 // pred_region
      _
    $region21: #{tpu_custom_call.1} parent=1 // pred_fallthru
      _
    // Predicated region
    $region22: #{tpu_custom_call.1} parent=1 // pred_check
      _
    $region23: #{tpu_custom_call.1} parent=1 // pred_check_branch
      %57 = sbr.rel (0) target = $region25
    $region24: #{tpu_custom_call.1} parent=1 // pred_region
      %s59 = ssub.s32 2048, 2048
      %60 = vsyncadd [#allocation9], %s59
      %s61 = sshll.u32 [#allocation8], 4
      %s62 = int_to_ptr.vmem [resolvable:$true] %s61
      %67 = dma.hbm_to_vmem [thread:$0]  %s5, 2048, %s62, [#allocation9], 128, 128, 8
    $region25: #{tpu_custom_call.1} parent=1 // pred_fallthru
      _
    // Predicated region
    $region26: #{tpu_custom_call.1} parent=1 // pred_check
      _
    $region27: #{tpu_custom_call.1} parent=1 // pred_check_branch
      %69 = sbr.rel (0) target = $region29
    $region28: #{tpu_custom_call.1} parent=1 // pred_region
      _
    $region29: #{tpu_custom_call.1} parent=1 // pred_fallthru
      _
    // Predicated region
    $region30: #{tpu_custom_call.1} parent=1 // pred_check
      _
    $region31: #{tpu_custom_call.1} parent=1 // pred_check_branch
      %71 = sbr.rel (0) target = $region33
    $region32: #{tpu_custom_call.1} parent=1 // pred_region
      %s73 = ssub.s32 2048, 2048
      %74 = vsyncadd [#allocation9], %s73
      %s75 = sshll.u32 [#allocation10], 4
      %s76 = int_to_ptr.vmem [resolvable:$true] %s75
      %81 = dma.hbm_to_vmem [thread:$0]  %s7, 2048, %s76, [#allocation9], 64, 64, 4
    $region33: #{tpu_custom_call.1} parent=1 // pred_fallthru
      _
    // Predicated region
    $region34: #{tpu_custom_call.1} parent=1 // pred_check
      _
    $region35: #{tpu_custom_call.1} parent=1 // pred_check_branch
      %83 = sbr.rel (0) target = $region37
    $region36: #{tpu_custom_call.1} parent=1 // pred_region
      _
    $region37: #{tpu_custom_call.1} parent=1 // pred_fallthru
      _
    // Predicated region
    $region38: #{tpu_custom_call.1} parent=1 // pred_check
      _
    $region39: #{tpu_custom_call.1} parent=1 // pred_check_branch
      %85 = sbr.rel (0) target = $region41
    $region40: #{tpu_custom_call.1} parent=1 // pred_region
      %86 = dma.done [#allocation3], 128
    $region41: #{tpu_custom_call.1} parent=1 // pred_fallthru
      _
    // Predicated region
    $region42: #{tpu_custom_call.1} parent=1 // pred_check
      _
    $region43: #{tpu_custom_call.1} parent=1 // pred_check_branch
      %88 = sbr.rel (0) target = $region45
    $region44: #{tpu_custom_call.1} parent=1 // pred_region
      %89 = dma.done [#allocation6], 256
    $region45: #{tpu_custom_call.1} parent=1 // pred_fallthru
      _
    // Predicated region
    $region46: #{tpu_custom_call.1} parent=1 // pred_check
      _
    $region47: #{tpu_custom_call.1} parent=1 // pred_check_branch
      %91 = sbr.rel (0) target = $region49
    $region48: #{tpu_custom_call.1} parent=1 // pred_region
      %92 = dma.done [#allocation6], 1024
    $region49: #{tpu_custom_call.1} parent=1 // pred_fallthru
      _
    // Predicated region
    $region50: #{tpu_custom_call.1} parent=1 // pred_check
      _
    $region51: #{tpu_custom_call.1} parent=1 // pred_check_branch
      %94 = sbr.rel (0) target = $region53
    $region52: #{tpu_custom_call.1} parent=1 // pred_region
      %95 = dma.done [#allocation9], 2048
    $region53: #{tpu_custom_call.1} parent=1 // pred_fallthru
      _
    // Predicated region
    $region54: #{tpu_custom_call.1} parent=1 // pred_check
      _
    $region55: #{tpu_custom_call.1} parent=1 // pred_check_branch
      %97 = sbr.rel (0) target = $region57
    $region56: #{tpu_custom_call.1} parent=1 // pred_region
      %98 = dma.done [#allocation9], 2048
    $region57: #{tpu_custom_call.1} parent=1 // pred_fallthru
      _
    %v100 = vld [vmem:[#allocation2] sm:$0xff]
    %v101 = vpack.c.bf16 %v100, %v100
    %v102 = vld [vmem:[#allocation5] sm:$0xf]
    %v103 = vld [vmem:[#allocation5 + $0x4] sm:$0xf]
    %v104 = vld [vmem:[#allocation5 + $0x8] sm:$0xf]
    %v105 = vld [vmem:[#allocation5 + $0xc] sm:$0xf]
    %v106 = vld [vmem:[%s2] sm:$0x1]
    %v108 = vlaneseq
    %v109 = vshrl.u32 %v108, 7
    %v110 = vsub.s32 0, %v109
    %v111 = vrot.slane %v106, %v110
    %v117 = vunpack.c.l.b16 %v102
    %v118 = vunpack.c.l.b16 %v103
    %v119 = vunpack.c.l.b16 %v104
    %v120 = vunpack.c.l.b16 %v105
    %v121 = vpack.c.b16 %v118, %v117
    %v122 = vpack.c.b16 %v120, %v119
    %vm125 = vcmask 261120
    %v127 = vsel %vm125, %v101, 0
    %129 = vmatprep.subr.bf16.mxu0 0
    %130 = vmatpush1.bf16.msra.mxu0 %v121
    %131 = vmatprep.subr.bf16.mxu0 0
    %132 = vmatpush1.bf16.msra.mxu0 %v122
    %133 = vmatprep.subr.bf16.mxu0 0
    %134 = vmatpush1.bf16.msra.mxu0 0
    %135 = vmatprep.subr.bf16.mxu0 0
    %136 = vmatpush1.bf16.msra.mxu0 0
    %137 = vmatprep.subr.bf16.mxu0 0
    %138 = vmatpush1.bf16.msra.mxu0 0
    %139 = vmatprep.subr.bf16.mxu0 0
    %140 = vmatpush1.bf16.msra.mxu0 0
    %141 = vmatprep.subr.bf16.mxu0 0
    %142 = vmatpush1.bf16.msra.mxu0 0
    %143 = vmatprep.subr.bf16.mxu0 0
    %144 = vmatpush1.bf16.msra.mxu0 0
    %145 = vmatprep.subr.bf16.mxu0 0
    %146 = vmatpush1.bf16.msra.mxu0 0
    %147 = vmatprep.subr.bf16.mxu0 0
    %148 = vmatpush1.bf16.msra.mxu0 0
    %149 = vmatprep.subr.bf16.mxu0 0
    %150 = vmatpush1.bf16.msra.mxu0 0
    %151 = vmatprep.subr.bf16.mxu0 0
    %152 = vmatpush1.bf16.msra.mxu0 0
    %153 = vmatprep.subr.bf16.mxu0 0
    %154 = vmatpush1.bf16.msra.mxu0 0
    %155 = vmatprep.subr.bf16.mxu0 0
    %156 = vmatpush1.bf16.msra.mxu0 0
    %157 = vmatprep.subr.bf16.mxu0 0
    %158 = vmatpush1.bf16.msra.mxu0 0
    %159 = vmatprep.subr.bf16.mxu0 0
    %160 = vmatpush1.bf16.msra.mxu0 0
    %161 = vmatprep.mubr.bf16.mxu0 0
    %162 = vmatmul.mubr.bf16.gmra.mrb[0].mxu0 %v127
    %v163 = vpop.f32.mrb[0].mxu0
    %v164 = vadd.f32 %v111, %v163
    %v165 = vpop.f32.mrb[0].mxu0
    %v166 = vpop.f32.mrb[0].mxu0
    %v167 = vpop.f32.mrb[0].mxu0
    %168 = vdwg.mxu0
    %v169 = vmax.f32 %v164, 0.0
    %v170 = vpack.c.bf16 %v169, %v169
    %v171 = vld [vmem:[#allocation7] sm:$0xf]
    %v172 = vld [vmem:[#allocation7 + $0x4] sm:$0xf]
    %v173 = vld [vmem:[#allocation7 + $0x8] sm:$0xf]
    %v174 = vld [vmem:[#allocation7 + $0xc] sm:$0xf]
    %v175 = vld [vmem:[#allocation7 + $0x10] sm:$0xf]
    %v176 = vld [vmem:[#allocation7 + $0x14] sm:$0xf]
    %v177 = vld [vmem:[#allocation7 + $0x18] sm:$0xf]
    %v178 = vld [vmem:[#allocation7 + $0x1c] sm:$0xf]
    %v179 = vld [vmem:[#allocation7 + $0x20] sm:$0xf]
    %v180 = vld [vmem:[#allocation7 + $0x24] sm:$0xf]
    %v181 = vld [vmem:[#allocation7 + $0x28] sm:$0xf]
    %v182 = vld [vmem:[#allocation7 + $0x2c] sm:$0xf]
    %v183 = vld [vmem:[#allocation7 + $0x30] sm:$0xf]
    %v184 = vld [vmem:[#allocation7 + $0x34] sm:$0xf]
    %v185 = vld [vmem:[#allocation7 + $0x38] sm:$0xf]
    %v186 = vld [vmem:[#allocation7 + $0x3c] sm:$0xf]
    %v187 = vld [vmem:[%s4] sm:$0x1]
    %v189 = vlaneseq
    %v190 = vshrl.u32 %v189, 7
    %v191 = vsub.s32 0, %v190
    %v192 = vrot.slane %v187, %v191
    %v210 = vunpack.c.l.b16 %v171
    %v211 = vunpack.c.l.b16 %v172
    %v212 = vunpack.c.l.b16 %v173
    %v213 = vunpack.c.l.b16 %v174
    %v214 = vunpack.c.l.b16 %v175
    %v215 = vunpack.c.l.b16 %v176
    %v216 = vunpack.c.l.b16 %v177
    %v217 = vunpack.c.l.b16 %v178
    %v218 = vunpack.c.l.b16 %v179
    %v219 = vunpack.c.l.b16 %v180
    %v220 = vunpack.c.l.b16 %v181
    %v221 = vunpack.c.l.b16 %v182
    %v222 = vunpack.c.l.b16 %v183
    %v223 = vunpack.c.l.b16 %v184
    %v224 = vunpack.c.l.b16 %v185
    %v225 = vunpack.c.l.b16 %v186
    %v226 = vpack.c.b16 %v211, %v210
    %v227 = vpack.c.b16 %v213, %v212
    %v228 = vpack.c.b16 %v215, %v214
    %v229 = vpack.c.b16 %v217, %v216
    %v230 = vpack.c.b16 %v219, %v218
    %v231 = vpack.c.b16 %v221, %v220
    %v232 = vpack.c.b16 %v223, %v222
    %v233 = vpack.c.b16 %v225, %v224
    %242 = vmatprep.subr.bf16.mxu0 0
    %243 = vmatpush1.bf16.msra.mxu0 %v226
    %244 = vmatprep.subr.bf16.mxu0 0
    %245 = vmatpush1.bf16.msra.mxu0 %v227
    %246 = vmatprep.subr.bf16.mxu0 0
    %247 = vmatpush1.bf16.msra.mxu0 %v228
    %248 = vmatprep.subr.bf16.mxu0 0
    %249 = vmatpush1.bf16.msra.mxu0 %v229
    %250 = vmatprep.subr.bf16.mxu0 0
    %251 = vmatpush1.bf16.msra.mxu0 %v230
    %252 = vmatprep.subr.bf16.mxu0 0
    %253 = vmatpush1.bf16.msra.mxu0 %v231
    %254 = vmatprep.subr.bf16.mxu0 0
    %255 = vmatpush1.bf16.msra.mxu0 %v232
    %256 = vmatprep.subr.bf16.mxu0 0
    %257 = vmatpush1.bf16.msra.mxu0 %v233
    %258 = vmatprep.subr.bf16.mxu0 0
    %259 = vmatpush1.bf16.msra.mxu0 0
    %260 = vmatprep.subr.bf16.mxu0 0
    %261 = vmatpush1.bf16.msra.mxu0 0
    %262 = vmatprep.subr.bf16.mxu0 0
    %263 = vmatpush1.bf16.msra.mxu0 0
    %264 = vmatprep.subr.bf16.mxu0 0
    %265 = vmatpush1.bf16.msra.mxu0 0
    %266 = vmatprep.subr.bf16.mxu0 0
    %267 = vmatpush1.bf16.msra.mxu0 0
    %268 = vmatprep.subr.bf16.mxu0 0
    %269 = vmatpush1.bf16.msra.mxu0 0
    %270 = vmatprep.subr.bf16.mxu0 0
    %271 = vmatpush1.bf16.msra.mxu0 0
    %272 = vmatprep.subr.bf16.mxu0 0
    %273 = vmatpush1.bf16.msra.mxu0 0
    %274 = vmatprep.mubr.bf16.mxu0 0
    %275 = vmatmul.mubr.bf16.gmra.mrb[0].mxu0 %v170
    %v276 = vpop.f32.mrb[0].mxu0
    %v277 = vadd.f32 %v192, %v276
    %v278 = vpop.f32.mrb[0].mxu0
    %v279 = vpop.f32.mrb[0].mxu0
    %v280 = vpop.f32.mrb[0].mxu0
    %281 = vdwg.mxu0
    %v282 = vmax.f32 %v277, 0.0
    %v283 = vpack.c.bf16 %v282, %v282
    %v284 = vld [vmem:[#allocation8] sm:$0xff]
    %v285 = vld [vmem:[#allocation8 + $0x8] sm:$0xff]
    %v286 = vld [vmem:[#allocation8 + $0x10] sm:$0xff]
    %v287 = vld [vmem:[#allocation8 + $0x18] sm:$0xff]
    %v288 = vld [vmem:[#allocation8 + $0x20] sm:$0xff]
    %v289 = vld [vmem:[#allocation8 + $0x28] sm:$0xff]
    %v290 = vld [vmem:[#allocation8 + $0x30] sm:$0xff]
    %v291 = vld [vmem:[#allocation8 + $0x38] sm:$0xff]
    %v292 = vld [vmem:[#allocation8 + $0x40] sm:$0xff]
    %v293 = vld [vmem:[#allocation8 + $0x48] sm:$0xff]
    %v294 = vld [vmem:[#allocation8 + $0x50] sm:$0xff]
    %v295 = vld [vmem:[#allocation8 + $0x58] sm:$0xff]
    %v296 = vld [vmem:[#allocation8 + $0x60] sm:$0xff]
    %v297 = vld [vmem:[#allocation8 + $0x68] sm:$0xff]
    %v298 = vld [vmem:[#allocation8 + $0x70] sm:$0xff]
    %v299 = vld [vmem:[#allocation8 + $0x78] sm:$0xff]
    %v300 = vld [vmem:[%s6] sm:$0x3]
    %v302 = vlaneseq
    %v303 = vshrl.u32 %v302, 7
    %v304 = vsub.s32 0, %v303
    %v305 = vrot.slane %v300, %v304
    %v306 = vlaneseq
    %v307 = vshrl.u32 %v306, 7
    %v308 = vsub.s32 1, %v307
    %v309 = vrot.slane %v300, %v308
    %v328 = vunpack.c.l.b16 %v284
    %v329 = vunpack.c.h.b16 %v284
    %v330 = vunpack.c.l.b16 %v285
    %v331 = vunpack.c.h.b16 %v285
    %v332 = vunpack.c.l.b16 %v286
    %v333 = vunpack.c.h.b16 %v286
    %v334 = vunpack.c.l.b16 %v287
    %v335 = vunpack.c.h.b16 %v287
    %v336 = vunpack.c.l.b16 %v288
    %v337 = vunpack.c.h.b16 %v288
    %v338 = vunpack.c.l.b16 %v289
    %v339 = vunpack.c.h.b16 %v289
    %v340 = vunpack.c.l.b16 %v290
    %v341 = vunpack.c.h.b16 %v290
    %v342 = vunpack.c.l.b16 %v291
    %v343 = vunpack.c.h.b16 %v291
    %v344 = vunpack.c.l.b16 %v292
    %v345 = vunpack.c.h.b16 %v292
    %v346 = vunpack.c.l.b16 %v293
    %v347 = vunpack.c.h.b16 %v293
    %v348 = vunpack.c.l.b16 %v294
    %v349 = vunpack.c.h.b16 %v294
    %v350 = vunpack.c.l.b16 %v295
    %v351 = vunpack.c.h.b16 %v295
    %v352 = vunpack.c.l.b16 %v296
    %v353 = vunpack.c.h.b16 %v296
    %v354 = vunpack.c.l.b16 %v297
    %v355 = vunpack.c.h.b16 %v297
    %v356 = vunpack.c.l.b16 %v298
    %v357 = vunpack.c.h.b16 %v298
    %v358 = vunpack.c.l.b16 %v299
    %v359 = vunpack.c.h.b16 %v299
    %v360 = vpack.c.b16 %v330, %v328
    %v361 = vpack.c.b16 %v331, %v329
    %v362 = vpack.c.b16 %v334, %v332
    %v363 = vpack.c.b16 %v335, %v333
    %v364 = vpack.c.b16 %v338, %v336
    %v365 = vpack.c.b16 %v339, %v337
    %v366 = vpack.c.b16 %v342, %v340
    %v367 = vpack.c.b16 %v343, %v341
    %v368 = vpack.c.b16 %v346, %v344
    %v369 = vpack.c.b16 %v347, %v345
    %v370 = vpack.c.b16 %v350, %v348
    %v371 = vpack.c.b16 %v351, %v349
    %v372 = vpack.c.b16 %v354, %v352
    %v373 = vpack.c.b16 %v355, %v353
    %v374 = vpack.c.b16 %v358, %v356
    %v375 = vpack.c.b16 %v359, %v357
    %392 = vmatprep.subr.bf16.mxu0 %v361
    %393 = vmatpush1.bf16.msra.mxu0 %v360
    %394 = vmatprep.subr.bf16.mxu0 %v363
    %395 = vmatpush1.bf16.msra.mxu0 %v362
    %396 = vmatprep.subr.bf16.mxu0 %v365
    %397 = vmatpush1.bf16.msra.mxu0 %v364
    %398 = vmatprep.subr.bf16.mxu0 %v367
    %399 = vmatpush1.bf16.msra.mxu0 %v366
    %400 = vmatprep.subr.bf16.mxu0 %v369
    %401 = vmatpush1.bf16.msra.mxu0 %v368
    %402 = vmatprep.subr.bf16.mxu0 %v371
    %403 = vmatpush1.bf16.msra.mxu0 %v370
    %404 = vmatprep.subr.bf16.mxu0 %v373
    %405 = vmatpush1.bf16.msra.mxu0 %v372
    %406 = vmatprep.subr.bf16.mxu0 %v375
    %407 = vmatpush1.bf16.msra.mxu0 %v374
    %408 = vmatprep.subr.bf16.mxu0 0
    %409 = vmatpush1.bf16.msra.mxu0 0
    %410 = vmatprep.subr.bf16.mxu0 0
    %411 = vmatpush1.bf16.msra.mxu0 0
    %412 = vmatprep.subr.bf16.mxu0 0
    %413 = vmatpush1.bf16.msra.mxu0 0
    %414 = vmatprep.subr.bf16.mxu0 0
    %415 = vmatpush1.bf16.msra.mxu0 0
    %416 = vmatprep.subr.bf16.mxu0 0
    %417 = vmatpush1.bf16.msra.mxu0 0
    %418 = vmatprep.subr.bf16.mxu0 0
    %419 = vmatpush1.bf16.msra.mxu0 0
    %420 = vmatprep.subr.bf16.mxu0 0
    %421 = vmatpush1.bf16.msra.mxu0 0
    %422 = vmatprep.subr.bf16.mxu0 0
    %423 = vmatpush1.bf16.msra.mxu0 0
    %424 = vmatprep.mubr.bf16.mxu0 0
    %425 = vmatmul.mubr.bf16.gmra.mrb[0].mxu0 %v283
    %v426 = vpop.f32.mrb[0].mxu0
    %v427 = vadd.f32 %v305, %v426
    %v428 = vpop.f32.mrb[0].mxu0
    %v429 = vadd.f32 %v309, %v428
    %v430 = vpop.f32.mrb[0].mxu0
    %v431 = vpop.f32.mrb[0].mxu0
    %432 = vdwg.mxu0
    %v433 = vmax.f32 %v427, 0.0
    %v434 = vmax.f32 %v429, 0.0
    %v435 = vpack.c.bf16 %v433, %v433
    %v436 = vpack.c.bf16 %v434, %v434
    %v437 = vld [vmem:[#allocation10] sm:$0xf]
    %v438 = vld [vmem:[#allocation10 + $0x4] sm:$0xf]
    %v439 = vld [vmem:[#allocation10 + $0x8] sm:$0xf]
    %v440 = vld [vmem:[#allocation10 + $0xc] sm:$0xf]
    %v441 = vld [vmem:[#allocation10 + $0x10] sm:$0xf]
    %v442 = vld [vmem:[#allocation10 + $0x14] sm:$0xf]
    %v443 = vld [vmem:[#allocation10 + $0x18] sm:$0xf]
    %v444 = vld [vmem:[#allocation10 + $0x1c] sm:$0xf]
    %v445 = vld [vmem:[#allocation10 + $0x20] sm:$0xf]
    %v446 = vld [vmem:[#allocation10 + $0x24] sm:$0xf]
    %v447 = vld [vmem:[#allocation10 + $0x28] sm:$0xf]
    %v448 = vld [vmem:[#allocation10 + $0x2c] sm:$0xf]
    %v449 = vld [vmem:[#allocation10 + $0x30] sm:$0xf]
    %v450 = vld [vmem:[#allocation10 + $0x34] sm:$0xf]
    %v451 = vld [vmem:[#allocation10 + $0x38] sm:$0xf]
    %v452 = vld [vmem:[#allocation10 + $0x3c] sm:$0xf]
    %v453 = vld [vmem:[#allocation10 + $0x40] sm:$0xf]
    %v454 = vld [vmem:[#allocation10 + $0x44] sm:$0xf]
    %v455 = vld [vmem:[#allocation10 + $0x48] sm:$0xf]
    %v456 = vld [vmem:[#allocation10 + $0x4c] sm:$0xf]
    %v457 = vld [vmem:[#allocation10 + $0x50] sm:$0xf]
    %v458 = vld [vmem:[#allocation10 + $0x54] sm:$0xf]
    %v459 = vld [vmem:[#allocation10 + $0x58] sm:$0xf]
    %v460 = vld [vmem:[#allocation10 + $0x5c] sm:$0xf]
    %v461 = vld [vmem:[#allocation10 + $0x60] sm:$0xf]
    %v462 = vld [vmem:[#allocation10 + $0x64] sm:$0xf]
    %v463 = vld [vmem:[#allocation10 + $0x68] sm:$0xf]
    %v464 = vld [vmem:[#allocation10 + $0x6c] sm:$0xf]
    %v465 = vld [vmem:[#allocation10 + $0x70] sm:$0xf]
    %v466 = vld [vmem:[#allocation10 + $0x74] sm:$0xf]
    %v467 = vld [vmem:[#allocation10 + $0x78] sm:$0xf]
    %v468 = vld [vmem:[#allocation10 + $0x7c] sm:$0xf]
    %v469 = vld [vmem:[%s8] sm:$0x1]
    %v471 = vlaneseq
    %v472 = vshrl.u32 %v471, 7
    %v473 = vsub.s32 0, %v472
    %v474 = vrot.slane %v469, %v473
    %v508 = vunpack.c.l.b16 %v437
    %v509 = vunpack.c.l.b16 %v438
    %v510 = vunpack.c.l.b16 %v439
    %v511 = vunpack.c.l.b16 %v440
    %v512 = vunpack.c.l.b16 %v441
    %v513 = vunpack.c.l.b16 %v442
    %v514 = vunpack.c.l.b16 %v443
    %v515 = vunpack.c.l.b16 %v444
    %v516 = vunpack.c.l.b16 %v445
    %v517 = vunpack.c.l.b16 %v446
    %v518 = vunpack.c.l.b16 %v447
    %v519 = vunpack.c.l.b16 %v448
    %v520 = vunpack.c.l.b16 %v449
    %v521 = vunpack.c.l.b16 %v450
    %v522 = vunpack.c.l.b16 %v451
    %v523 = vunpack.c.l.b16 %v452
    %v524 = vunpack.c.l.b16 %v453
    %v525 = vunpack.c.l.b16 %v454
    %v526 = vunpack.c.l.b16 %v455
    %v527 = vunpack.c.l.b16 %v456
    %v528 = vunpack.c.l.b16 %v457
    %v529 = vunpack.c.l.b16 %v458
    %v530 = vunpack.c.l.b16 %v459
    %v531 = vunpack.c.l.b16 %v460
    %v532 = vunpack.c.l.b16 %v461
    %v533 = vunpack.c.l.b16 %v462
    %v534 = vunpack.c.l.b16 %v463
    %v535 = vunpack.c.l.b16 %v464
    %v536 = vunpack.c.l.b16 %v465
    %v537 = vunpack.c.l.b16 %v466
    %v538 = vunpack.c.l.b16 %v467
    %v539 = vunpack.c.l.b16 %v468
    %v540 = vpack.c.b16 %v509, %v508
    %v541 = vpack.c.b16 %v511, %v510
    %v542 = vpack.c.b16 %v513, %v512
    %v543 = vpack.c.b16 %v515, %v514
    %v544 = vpack.c.b16 %v517, %v516
    %v545 = vpack.c.b16 %v519, %v518
    %v546 = vpack.c.b16 %v521, %v520
    %v547 = vpack.c.b16 %v523, %v522
    %v548 = vpack.c.b16 %v525, %v524
    %v549 = vpack.c.b16 %v527, %v526
    %v550 = vpack.c.b16 %v529, %v528
    %v551 = vpack.c.b16 %v531, %v530
    %v552 = vpack.c.b16 %v533, %v532
    %v553 = vpack.c.b16 %v535, %v534
    %v554 = vpack.c.b16 %v537, %v536
    %v555 = vpack.c.b16 %v539, %v538
    %572 = vmatprep.subr.bf16.mxu0 0
    %573 = vmatpush1.bf16.msra.mxu0 %v540
    %574 = vmatprep.subr.bf16.mxu0 0
    %575 = vmatpush1.bf16.msra.mxu0 %v541
    %576 = vmatprep.subr.bf16.mxu0 0
    %577 = vmatpush1.bf16.msra.mxu0 %v542
    %578 = vmatprep.subr.bf16.mxu0 0
    %579 = vmatpush1.bf16.msra.mxu0 %v543
    %580 = vmatprep.subr.bf16.mxu0 0
    %581 = vmatpush1.bf16.msra.mxu0 %v544
    %582 = vmatprep.subr.bf16.mxu0 0
    %583 = vmatpush1.bf16.msra.mxu0 %v545
    %584 = vmatprep.subr.bf16.mxu0 0
    %585 = vmatpush1.bf16.msra.mxu0 %v546
    %586 = vmatprep.subr.bf16.mxu0 0
    %587 = vmatpush1.bf16.msra.mxu0 %v547
    %588 = vmatprep.subr.bf16.mxu0 0
    %589 = vmatpush1.bf16.msra.mxu0 %v548
    %590 = vmatprep.subr.bf16.mxu0 0
    %591 = vmatpush1.bf16.msra.mxu0 %v549
    %592 = vmatprep.subr.bf16.mxu0 0
    %593 = vmatpush1.bf16.msra.mxu0 %v550
    %594 = vmatprep.subr.bf16.mxu0 0
    %595 = vmatpush1.bf16.msra.mxu0 %v551
    %596 = vmatprep.subr.bf16.mxu0 0
    %597 = vmatpush1.bf16.msra.mxu0 %v552
    %598 = vmatprep.subr.bf16.mxu0 0
    %599 = vmatpush1.bf16.msra.mxu0 %v553
    %600 = vmatprep.subr.bf16.mxu0 0
    %601 = vmatpush1.bf16.msra.mxu0 %v554
    %602 = vmatprep.subr.bf16.mxu0 0
    %603 = vmatpush1.bf16.msra.mxu0 %v555
    %604 = vmatprep.mubr.bf16.mxu0 %v436
    %605 = vmatmul.mubr.bf16.gmra.mrb[0].mxu0 %v435
    %v606 = vpop.f32.mrb[0].mxu0
    %v607 = vadd.f32 %v474, %v606
    %v608 = vpop.f32.mrb[0].mxu0
    %v609 = vpop.f32.mrb[0].mxu0
    %v610 = vpop.f32.mrb[0].mxu0
    %611 = vdwg.mxu0
    %612 = vadd.xlane.f32.xlu0 %v607
    %v613 = vpop.xlane.xlu0 %612
    %v614 = vsub.f32 %v613, %v607
    %s615 = smul.u32 0, 8
    %v616 = vlaneseq
    %v617 = vshrl.u32 %v616, 7
    %v618 = vstv %s615
    %v619 = vadd.s32 %v618, %v617
    %vm620 = vcmp.lt.s32.totalorder %v619, 4
    %v621 = vsel %vm620, %v614, 0.0
    %623 = vrot.lane.b32.xlu0 %v621, 112
    %v624 = vpop.permute.xlu0 %623
    %vm626 = vcmask 7168
    %v627 = vsel %vm626, %v624, 0.0
    %628 = vadd.xlane.f32.xlu0 %v627
    %v629 = vpop.xlane.xlu0 %628
    %v630 = vrot.slane %v629, 4
    %v631 = vadd.f32 %v629, %v630
    %v632 = vrot.slane %v631, 2
    %v633 = vadd.f32 %v631, %v632
    %v634 = vrot.slane %v633, 1
    %v635 = vadd.f32 %v633, %v634
    %s636 = vtos %v635
    %v637 = vrcp.pop 64.0
    %s638 = vtos %v637
    %s639 = smul.f32 %s636, %s638
    %641 = vset.pattern.permute.xlu0 16
    %642 = vperm.xlu0 %641, %v607
    %v643 = vpop.permute.xlu0 %642
    %v645 = vadd.f32 %v607, %v643
    %v646 = vstv %s639
    %v647 = vsub.f32 %v645, %v646
    %648 = vst [vmem:[#allocation11] sm:$0xff] %v647
    // Predicated region
    $region58: #{tpu_custom_call.1} parent=1 // pred_check
      _
    $region59: #{tpu_custom_call.1} parent=1 // pred_check_branch
      %650 = sbr.rel (0) target = $region61
    $region60: #{tpu_custom_call.1} parent=1 // pred_region
      %s652 = ssub.s32 128, 128
      %653 = vsyncadd [#allocation4], %s652
      %s655 = sshll.u32 [#allocation11], 4
      %s656 = int_to_ptr.vmem [resolvable:$true] %s655
      %658 = dma.vmem_to_hbm [thread:$0]  %s656, 128, %s9, [#allocation4]
    $region61: #{tpu_custom_call.1} parent=1 // pred_fallthru
      _
    // Predicated region
    $region62: #{tpu_custom_call.1} parent=1 // pred_check
      _
    $region63: #{tpu_custom_call.1} parent=1 // pred_check_branch
      %660 = sbr.rel (0) target = $region65
    $region64: #{tpu_custom_call.1} parent=1 // pred_region
      %661 = dma.done [#allocation4], 128
    $region65: #{tpu_custom_call.1} parent=1 // pred_fallthru
      _
    %662 = vsyncpa [#allocation3], 1
    %663 = vsyncpa [#allocation6], 1
    %664 = vsyncpa [#allocation9], 1
    %665 = vsyncpa [#allocation4], 1

</llo_original>
